<compile_context>
chip_gen: v7x
topology: tpu7x:2x2x1
jax: 0.10.0
libtpu: 0.0.40
codegen_flags: <defaults>
</compile_context>

<pallas_src>
import functools

import jax
import jax.numpy as jnp
from jax import lax
from jax.experimental import pallas as pl
from jax.experimental.pallas import tpu as pltpu

HIST_LEN = 10        # histogram bins: centers are linspace(0, 1, 10)
_PAD_GT = 2.0        # gt pad sentinel -> matches no bin -> weight 0
_PAD_PRED = 0.5      # any value in (0,1): keeps the (zero-weighted) BCE finite


def _cdiv(a, b):
    return -(-a // b)


def _round_up(a, b):
    return _cdiv(a, b) * b


def _default_n_cores():
    # v7x-class chips have 2 TensorCores per chip; v5e/v6e have 1.  A size-1
    # leading "parallel" axis costs nothing, so default conservatively to 1.
    try:
        kind = jax.devices()[0].device_kind.lower()
    except Exception:
        return 1
    return 2 if ("v7" in kind or "7x" in kind) else 1


# ----------------------------------------------------------------------------
# Pallas kernel: weighted-BCE partial sums
# ----------------------------------------------------------------------------
def _geneo_bce_kernel(w_ref, yp_ref, yg_ref, s1_ref, s2_ref, *,
                      n_bins, tile_rows, steps, valid_rows):
    # w_ref : (n_bins,) f32 per-bin weight table in SMEM (scalar prefetch)
    # yp_ref/yg_ref : (tile_rows, 128) tiles of y_pred / y_gt
    # s1_ref/s2_ref : (1, 8, 128) resident accumulator blocks (per core index)

    # Zero the resident accumulator block at the start of the reduction axis.
    @pl.when(pl.program_id(1) == 0)
    def _():
        s1_ref[...] = jnp.zeros_like(s1_ref)
        s2_ref[...] = jnp.zeros_like(s2_ref)

    y_gt = yg_ref[...].astype(jnp.float32)
    y_pred = yp_ref[...].astype(jnp.float32)

    # Closed-form nearest histogram bin for ranges == linspace(0, 1, n_bins):
    #   argmin_k |y - k/(n_bins-1)| == ceil(y*(n_bins-1) - 0.5)   for y in [0,1]
    # Compared directly against float bin indices: no clip, no int cast.
    # Values outside the bin range (garbage rows from the ragged last block,
    # or the 2.0 pad sentinel -> kf = 18) match no bin and keep weight 0.
    kf = jnp.ceil(y_gt * jnp.float32(n_bins - 1) - 0.5)

    # Per-bin dense weight lookup (table already folds the sequential
    # bin->freq replacement loop, the density normalization, alpha, epsilon).
    w = jnp.zeros(y_gt.shape, jnp.float32)
    for k in range(n_bins):
        w = jnp.where(kf == jnp.float32(k), w_ref[k], w)

    # BCE with the leading negation folded into the wrapper:
    #   y*log(p) + (1-y)*log(1-p) == y*(log_p - log_1mp) + log_1mp
    # PyTorch's BCELoss clamps each log at -100.
    log_p = jnp.maximum(jnp.log(y_pred), -100.0)
    log_1mp = jnp.maximum(jnp.log(1.0 - y_pred), -100.0)
    nbce = y_gt * (log_p - log_1mp) + log_1mp
    prod = w * nbce

    g = tile_rows // 8
    row_start = (pl.program_id(0) * steps + pl.program_id(1)) * tile_rows
    needs_mask = row_start + tile_rows > valid_rows

    # Fast path: tile fully inside the valid row range (the common case).
    @pl.when(jnp.logical_not(needs_mask))
    def _():
        s1_ref[...] += prod.reshape(g, 8, 128).sum(axis=0)[None]
        s2_ref[...] += w.reshape(g, 8, 128).sum(axis=0)[None]

    # Tail path: mask rows beyond the valid range (their data is garbage from
    # the partially out-of-bounds block; jnp.where also squashes any NaN/Inf
    # produced by the garbage before it can reach the accumulators).
    @pl.when(needs_mask)
    def _():
        row_iota = lax.broadcasted_iota(jnp.int32, (tile_rows, 128), 0)
        mask = row_iota < (valid_rows - row_start)
        s1_ref[...] += jnp.where(mask, prod, 0.0).reshape(g, 8, 128).sum(axis=0)[None]
        s2_ref[...] += jnp.where(mask, w, 0.0).reshape(g, 8, 128).sum(axis=0)[None]


def weighted_bce_pallas(y_pred, y_gt, w_table, *, max_tile_rows=2048,
                        n_cores=None):
    """Returns BCELoss(weight = w / mean(w), reduction='mean') == S1 / S2."""
    if n_cores is None:
        n_cores = _default_n_cores()
    n_cores = max(1, int(n_cores))

    shape = jnp.broadcast_shapes(y_pred.shape, y_gt.shape)

    def prep(x):
        # Keep f32/bf16 inputs in their native dtype (no forced HBM copy);
        # the kernel upcasts tiles to f32.
        if x.dtype not in (jnp.float32, jnp.bfloat16):
            x = x.astype(jnp.float32)
        if x.shape != shape:
            # TODO(synk): a genuinely-broadcast operand could be replicated via
            # the BlockSpec index_map instead of being materialized in HBM;
            # not needed for the common equal-shape case exercised here.
            x = jnp.broadcast_to(x, shape)
        return x.reshape(-1)          # contiguous flatten: free (no copy)

    yp, yg = prep(y_pred), prep(y_gt)

    n = yp.size
    lane_pad = (-n) % 128
    if lane_pad:
        # Only the sub-128 tail is sentinel-padded so the (rows, 128) reshape
        # is possible (gt sentinel maps to weight 0, pred 0.5 keeps the BCE
        # finite).  Whole-tile padding is handled by in-kernel masking, so the
        # full-array copy only happens for lane-misaligned element counts.
        yp = jnp.concatenate([yp, jnp.full((lane_pad,), _PAD_PRED, yp.dtype)])
        yg = jnp.concatenate([yg, jnp.full((lane_pad,), _PAD_GT, yg.dtype)])

    rows = (n + lane_pad) // 128
    yp2 = yp.reshape(rows, 128)
    yg2 = yg.reshape(rows, 128)

    # Sublane granularity 16 also covers packed bf16 tiles.
    gran = 16 if (yp2.dtype == jnp.bfloat16 or yg2.dtype == jnp.bfloat16) else 8
    tile_rows = min(max_tile_rows,
                    max(gran, _round_up(_cdiv(rows, n_cores), gran)))
    row_tiles = _cdiv(rows, tile_rows)       # tiles that actually contain data
    steps = _cdiv(row_tiles, n_cores)
    last_tile = row_tiles - 1

    n_bins = int(w_table.shape[0])
    kernel = functools.partial(_geneo_bce_kernel, n_bins=n_bins,
                               tile_rows=tile_rows, steps=steps,
                               valid_rows=rows)

    def in_map(c, i, w):
        # Clamp so tiles whose nominal range lies entirely past the data
        # (possible when the multi-core split over-covers) just re-read the
        # last valid tile; their contribution is masked to zero in the kernel.
        return (jnp.minimum(c * steps + i, last_tile), 0)

    grid_spec = pltpu.PrefetchScalarGridSpec(
        num_scalar_prefetch=1,                 # weight table lives in SMEM
        grid=(n_cores, steps),                 # (parallel, reduction)
        in_specs=[
            pl.BlockSpec((tile_rows, 128), in_map),
            pl.BlockSpec((tile_rows, 128), in_map),
        ],
        out_specs=[
            pl.BlockSpec((1, 8, 128), lambda c, i, w: (c, 0, 0)),
            pl.BlockSpec((1, 8, 128), lambda c, i, w: (c, 0, 0)),
        ],
    )

    s1, s2 = pl.pallas_call(
        kernel,
        grid_spec=grid_spec,
        out_shape=(jax.ShapeDtypeStruct((n_cores, 8, 128), jnp.float32),
                   jax.ShapeDtypeStruct((n_cores, 8, 128), jnp.float32)),
        compiler_params=pltpu.CompilerParams(
            dimension_semantics=("parallel", "arbitrary")),
    )(w_table.astype(jnp.float32), yp2, yg2)

    # The kernel accumulates the un-negated BCE form; negate S1 once here.
    return -jnp.sum(s1) / jnp.sum(s2)


# ----------------------------------------------------------------------------
# GENEO_Loss_BCE (JAX port) — histogram init + scalar regularizers stay in JAX
# ----------------------------------------------------------------------------
def hist_frequency_estimation(targets, hist_len=HIST_LEN):
    # TODO(synk): the original caches this histogram via pickle on disk; the
    # cache / file IO is intentionally not reproduced.
    y = targets.reshape(-1)
    hist_range = jnp.linspace(0.0, 1.0, hist_len, dtype=jnp.float32)
    hist_idxs = jnp.argmin(jnp.abs(y[:, None] - hist_range[None, :]), axis=-1)
    hist_count = jnp.bincount(hist_idxs, length=hist_len)  # zero-pads empty bins
    return hist_count.astype(jnp.int32), hist_range


def build_weight_table(freqs, alpha, epsilon):
    """Per-bin weight = max(1 - alpha * dens(bin), epsilon).

    Faithfully reproduces get_dens_target's sequential in-place replacement
    loop (bug-for-bug: a replaced value equal to a *later* bin index gets
    replaced again) by simulating it on the bin indices 0..9 once.
    """
    n_bins = int(freqs.shape[0])
    vals = jnp.arange(n_bins, dtype=jnp.int32)
    for idx in range(n_bins):
        vals = jnp.where(vals == idx, freqs[idx], vals)
    dens = vals.astype(jnp.float32) / jnp.sum(freqs).astype(jnp.float32)
    return jnp.maximum(1.0 - jnp.float32(alpha) * dens, jnp.float32(epsilon))


class GENEOLossBCE:
    def __init__(self, targets, alpha=1, rho=1, epsilon=0.1, gamma=1):
        self.alpha = alpha
        self.rho = rho
        self.epsilon = epsilon
        self.gamma = gamma
        self.freqs, self.ranges = hist_frequency_estimation(targets)
        self.w_table = build_weight_table(self.freqs, alpha, epsilon)

    @staticmethod
    def _relu(x):
        return jnp.maximum(x, 0.0)

    def cvx_loss(self, cvx_coeffs, last_name):
        # TODO(synk): torch picks the last coefficient via requires_grad=False;
        # JAX has no per-leaf flag, so the name is passed explicitly.
        non_last = [v for k, v in cvx_coeffs.items() if k != last_name]
        total = sum(cvx_coeffs.values())
        last = cvx_coeffs[last_name]
        return self.rho * (sum(self._relu(-p) for p in non_last)
                           + self._relu(-(1.0 - total + last)))

    def positive_regularizer(self, params):
        return self.rho * sum(self._relu(-g) for g in params.values())

    def __call__(self, y_pred, y_gt, cvx_coeffs, last_cvx_name, geneo_params):
        bce = weighted_bce_pallas(y_pred, y_gt, self.w_table)
        cvx_l = self.cvx_loss(cvx_coeffs, last_cvx_name) if cvx_coeffs else 0.0
        geneo_l = (self.positive_regularizer(geneo_params)
                   if geneo_params else 0.0)
        return bce + cvx_l + geneo_l


# ----------------------------------------------------------------------------
# Pure-JAX reference of the weighted-BCE term (for a sanity check)
# ----------------------------------------------------------------------------
def _reference_weighted_bce(y_pred, y_gt, freqs, ranges, alpha, epsilon):
    shape = jnp.broadcast_shapes(y_pred.shape, y_gt.shape)
    yp = jnp.broadcast_to(y_pred, shape).astype(jnp.float32).reshape(-1)
    yg = jnp.broadcast_to(y_gt, shape).astype(jnp.float32).reshape(-1)
    idx = jnp.argmin(jnp.abs(yg[:, None] - ranges[None, :]), axis=-1)
    vals = idx.astype(jnp.int32)
    for k in range(int(freqs.shape[0])):
        vals = jnp.where(vals == k, freqs[k], vals)
    dens = vals.astype(jnp.float32) / jnp.sum(freqs).astype(jnp.float32)
    w = jnp.maximum(1.0 - alpha * dens, epsilon)
    wn = w / jnp.mean(w)
    log_p = jnp.maximum(jnp.log(yp), -100.0)
    log_1mp = jnp.maximum(jnp.log(1.0 - yp), -100.0)
    bce = -(yg * log_p + (1.0 - yg) * log_1mp)
    return jnp.mean(wn * bce)


# ----------------------------------------------------------------------------
if __name__ == "__main__":
    key = jax.random.PRNGKey(0)
    k_t, k_p, k_g = jax.random.split(key, 3)

    # histogram-estimation targets (GENEO_Loss.__init__ argument)
    targets = jax.random.uniform(k_t, (1024,), dtype=jnp.float32)

    # NCHW prediction / ground-truth probability grids
    shape = (2, 4, 16, 16)
    y_pred = jax.nn.sigmoid(jax.random.normal(k_p, shape, dtype=jnp.float32))
    y_gt = jax.random.uniform(k_g, shape, dtype=jnp.float32)

    # deterministic GENEO parameters (ParameterDicts of scalars);
    # "phi_neg" plays the role of the non-trainable last convex coefficient.
    cvx_coeffs = {
        "phi_cone": jnp.float32(0.4),
        "phi_cylinder": jnp.float32(0.35),
        "phi_neg": jnp.float32(0.25),
    }
    geneo_params = {
        "cone_sigma": jnp.float32(0.8),
        "cylinder_radius": jnp.float32(1.5),
        "neg_theta": jnp.float32(-0.2),   # negative -> regularizer kicks in
    }

    loss_fn = GENEOLossBCE(targets, alpha=1, rho=1, epsilon=0.1, gamma=1)
    loss = loss_fn(y_pred, y_gt, cvx_coeffs, "phi_neg", geneo_params)
    loss = jax.block_until_ready(loss)

    # sanity check of the Pallas weighted-BCE term against a pure-JAX reference
    bce_k = float(jax.block_until_ready(
        weighted_bce_pallas(y_pred, y_gt, loss_fn.w_table)))
    bce_r = float(_reference_weighted_bce(y_pred, y_gt, loss_fn.freqs,
                                          loss_fn.ranges, 1.0, 0.1))
    assert abs(bce_k - bce_r) <= 5e-3 * abs(bce_r) + 1e-5, (bce_k, bce_r)

    # extra check on a lane-aligned but tile-ragged shape (exercises the
    # in-kernel mask path instead of the old tail-padding concatenate)
    shape2 = (1, 3, 24, 16)   # 1152 elements = 9 rows of 128 (not 8-row tiled)
    yp2 = jax.nn.sigmoid(jax.random.normal(k_p, shape2, dtype=jnp.float32))
    yg2 = jax.random.uniform(k_g, shape2, dtype=jnp.float32)
    bce_k2 = float(jax.block_until_ready(
        weighted_bce_pallas(yp2, yg2, loss_fn.w_table)))
    bce_r2 = float(_reference_weighted_bce(yp2, yg2, loss_fn.freqs,
                                           loss_fn.ranges, 1.0, 0.1))
    assert abs(bce_k2 - bce_r2) <= 5e-3 * abs(bce_r2) + 1e-5, (bce_k2, bce_r2)

    print("KERNEL_OK")
</pallas_src>

<mosaic_0001>
module attributes {stable_mosaic.version = 11 : i64} {
  func.func @_geneo_bce_kernel(%arg0: i32, %arg1: i32, %arg2: memref<10xf32, #tpu.memory_space<smem>>, %arg3: memref<16x128xf32, #tpu.memory_space<vmem>>, %arg4: memref<16x128xf32, #tpu.memory_space<vmem>>, %arg5: memref<1x8x128xf32, #tpu.memory_space<vmem>>, %arg6: memref<1x8x128xf32, #tpu.memory_space<vmem>>) attributes {dimension_semantics = [#tpu.dimension_semantics<parallel>, #tpu.dimension_semantics<arbitrary>], iteration_bounds = array<i64: 1, 1>, scalar_prefetch = 1 : i64, scratch_operands = 0 : i64, tpu.core_type = #tpu.core_type<tc>, window_params = [{transform_indices = @transform_0, window_bounds = array<i64: 16, 128>}, {transform_indices = @transform_1, window_bounds = array<i64: 16, 128>}, {transform_indices = @transform_2, window_bounds = array<i64: 1, 8, 128>}, {transform_indices = @transform_3, window_bounds = array<i64: 1, 8, 128>}]} {
    %c0_i32 = arith.constant 0 : i32
    %0 = arith.cmpi eq, %arg1, %c0_i32 : i32
    %1 = arith.extui %0 : i1 to i32
    %c0_i32_0 = arith.constant 0 : i32
    %2 = arith.cmpi ne, %1, %c0_i32_0 : i32
    scf.if %2 {
      %cst_24 = arith.constant 0.000000e+00 : f32
      %83 = vector.broadcast %cst_24 : f32 to vector<1x8x128xf32>
      %c0_25 = arith.constant 0 : index
      %c0_26 = arith.constant 0 : index
      %c0_27 = arith.constant 0 : index
      %84 = vector.load %arg5[%c0_25, %c0_26, %c0_27] : memref<1x8x128xf32, #tpu.memory_space<vmem>>, vector<1x8x128xf32>
      tpu.vector_store %arg5[%c0_25, %c0_26, %c0_27], %83 {strides = array<i32>} : memref<1x8x128xf32, #tpu.memory_space<vmem>>, vector<1x8x128xf32>,
      %cst_28 = arith.constant 0.000000e+00 : f32
      %85 = vector.broadcast %cst_28 : f32 to vector<1x8x128xf32>
      %c0_29 = arith.constant 0 : index
      %c0_30 = arith.constant 0 : index
      %c0_31 = arith.constant 0 : index
      %86 = vector.load %arg6[%c0_29, %c0_30, %c0_31] : memref<1x8x128xf32, #tpu.memory_space<vmem>>, vector<1x8x128xf32>
      tpu.vector_store %arg6[%c0_29, %c0_30, %c0_31], %85 {strides = array<i32>} : memref<1x8x128xf32, #tpu.memory_space<vmem>>, vector<1x8x128xf32>,
    } else {
    }
    %c0 = arith.constant 0 : index
    %c0_1 = arith.constant 0 : index
    %3 = vector.load %arg4[%c0, %c0_1] : memref<16x128xf32, #tpu.memory_space<vmem>>, vector<16x128xf32>
    %c0_2 = arith.constant 0 : index
    %c0_3 = arith.constant 0 : index
    %4 = vector.load %arg3[%c0_2, %c0_3] : memref<16x128xf32, #tpu.memory_space<vmem>>, vector<16x128xf32>
    %cst = arith.constant 9.000000e+00 : f32
    %5 = vector.broadcast %cst : f32 to vector<16x128xf32>
    %6 = arith.mulf %3, %5 : vector<16x128xf32>
    %cst_4 = arith.constant 5.000000e-01 : f32
    %7 = vector.broadcast %cst_4 : f32 to vector<16x128xf32>
    %8 = arith.subf %6, %7 : vector<16x128xf32>
    %9 = math.ceil %8 : vector<16x128xf32>
    %cst_5 = arith.constant 0.000000e+00 : f32
    %10 = vector.broadcast %cst_5 : f32 to vector<16x128xf32>
    %cst_6 = arith.constant 0.000000e+00 : f32
    %11 = vector.broadcast %cst_6 : f32 to vector<16x128xf32>
    %12 = arith.cmpf oeq, %9, %11 : vector<16x128xf32>
    %c0_7 = arith.constant 0 : index
    %13 = memref.load %arg2[%c0_7] : memref<10xf32, #tpu.memory_space<smem>>
    %14 = vector.broadcast %13 : f32 to vector<16x128xf32>
    %15 = arith.select %12, %14, %10 : vector<16x128xi1>, vector<16x128xf32>
    %cst_8 = arith.constant 1.000000e+00 : f32
    %16 = vector.broadcast %cst_8 : f32 to vector<16x128xf32>
    %17 = arith.cmpf oeq, %9, %16 : vector<16x128xf32>
    %c1 = arith.constant 1 : index
    %18 = memref.load %arg2[%c1] : memref<10xf32, #tpu.memory_space<smem>>
    %19 = vector.broadcast %18 : f32 to vector<16x128xf32>
    %20 = arith.select %17, %19, %15 : vector<16x128xi1>, vector<16x128xf32>
    %cst_9 = arith.constant 2.000000e+00 : f32
    %21 = vector.broadcast %cst_9 : f32 to vector<16x128xf32>
    %22 = arith.cmpf oeq, %9, %21 : vector<16x128xf32>
    %c2 = arith.constant 2 : index
    %23 = memref.load %arg2[%c2] : memref<10xf32, #tpu.memory_space<smem>>
    %24 = vector.broadcast %23 : f32 to vector<16x128xf32>
    %25 = arith.select %22, %24, %20 : vector<16x128xi1>, vector<16x128xf32>
    %cst_10 = arith.constant 3.000000e+00 : f32
    %26 = vector.broadcast %cst_10 : f32 to vector<16x128xf32>
    %27 = arith.cmpf oeq, %9, %26 : vector<16x128xf32>
    %c3 = arith.constant 3 : index
    %28 = memref.load %arg2[%c3] : memref<10xf32, #tpu.memory_space<smem>>
    %29 = vector.broadcast %28 : f32 to vector<16x128xf32>
    %30 = arith.select %27, %29, %25 : vector<16x128xi1>, vector<16x128xf32>
    %cst_11 = arith.constant 4.000000e+00 : f32
    %31 = vector.broadcast %cst_11 : f32 to vector<16x128xf32>
    %32 = arith.cmpf oeq, %9, %31 : vector<16x128xf32>
    %c4 = arith.constant 4 : index
    %33 = memref.load %arg2[%c4] : memref<10xf32, #tpu.memory_space<smem>>
    %34 = vector.broadcast %33 : f32 to vector<16x128xf32>
    %35 = arith.select %32, %34, %30 : vector<16x128xi1>, vector<16x128xf32>
    %cst_12 = arith.constant 5.000000e+00 : f32
    %36 = vector.broadcast %cst_12 : f32 to vector<16x128xf32>
    %37 = arith.cmpf oeq, %9, %36 : vector<16x128xf32>
    %c5 = arith.constant 5 : index
    %38 = memref.load %arg2[%c5] : memref<10xf32, #tpu.memory_space<smem>>
    %39 = vector.broadcast %38 : f32 to vector<16x128xf32>
    %40 = arith.select %37, %39, %35 : vector<16x128xi1>, vector<16x128xf32>
    %cst_13 = arith.constant 6.000000e+00 : f32
    %41 = vector.broadcast %cst_13 : f32 to vector<16x128xf32>
    %42 = arith.cmpf oeq, %9, %41 : vector<16x128xf32>
    %c6 = arith.constant 6 : index
    %43 = memref.load %arg2[%c6] : memref<10xf32, #tpu.memory_space<smem>>
    %44 = vector.broadcast %43 : f32 to vector<16x128xf32>
    %45 = arith.select %42, %44, %40 : vector<16x128xi1>, vector<16x128xf32>
    %cst_14 = arith.constant 7.000000e+00 : f32
    %46 = vector.broadcast %cst_14 : f32 to vector<16x128xf32>
    %47 = arith.cmpf oeq, %9, %46 : vector<16x128xf32>
    %c7 = arith.constant 7 : index
    %48 = memref.load %arg2[%c7] : memref<10xf32, #tpu.memory_space<smem>>
    %49 = vector.broadcast %48 : f32 to vector<16x128xf32>
    %50 = arith.select %47, %49, %45 : vector<16x128xi1>, vector<16x128xf32>
    %cst_15 = arith.constant 8.000000e+00 : f32
    %51 = vector.broadcast %cst_15 : f32 to vector<16x128xf32>
    %52 = arith.cmpf oeq, %9, %51 : vector<16x128xf32>
    %c8 = arith.constant 8 : index
    %53 = memref.load %arg2[%c8] : memref<10xf32, #tpu.memory_space<smem>>
    %54 = vector.broadcast %53 : f32 to vector<16x128xf32>
    %55 = arith.select %52, %54, %50 : vector<16x128xi1>, vector<16x128xf32>
    %cst_16 = arith.constant 9.000000e+00 : f32
    %56 = vector.broadcast %cst_16 : f32 to vector<16x128xf32>
    %57 = arith.cmpf oeq, %9, %56 : vector<16x128xf32>
    %c9 = arith.constant 9 : index
    %58 = memref.load %arg2[%c9] : memref<10xf32, #tpu.memory_space<smem>>
    %59 = vector.broadcast %58 : f32 to vector<16x128xf32>
    %60 = arith.select %57, %59, %55 : vector<16x128xi1>, vector<16x128xf32>
    %61 = math.log %4 : vector<16x128xf32>
    %cst_17 = arith.constant -1.000000e+02 : f32
    %62 = vector.broadcast %cst_17 : f32 to vector<16x128xf32>
    %63 = arith.maximumf %61, %62 : vector<16x128xf32>
    %cst_18 = arith.constant 1.000000e+00 : f32
    %64 = vector.broadcast %cst_18 : f32 to vector<16x128xf32>
    %65 = arith.subf %64, %4 : vector<16x128xf32>
    %66 = math.log %65 : vector<16x128xf32>
    %cst_19 = arith.constant -1.000000e+02 : f32
    %67 = vector.broadcast %cst_19 : f32 to vector<16x128xf32>
    %68 = arith.maximumf %66, %67 : vector<16x128xf32>
    %69 = arith.subf %63, %68 : vector<16x128xf32>
    %70 = arith.mulf %3, %69 : vector<16x128xf32>
    %71 = arith.addf %70, %68 : vector<16x128xf32>
    %72 = arith.mulf %60, %71 : vector<16x128xf32>
    %c1_i32 = arith.constant 1 : i32
    %73 = arith.muli %arg0, %c1_i32 : i32
    %74 = arith.addi %73, %arg1 : i32
    %c16_i32 = arith.constant 16 : i32
    %75 = arith.muli %74, %c16_i32 : i32
    %c16_i32_20 = arith.constant 16 : i32
    %76 = arith.addi %75, %c16_i32_20 : i32
    %c16_i32_21 = arith.constant 16 : i32
    %77 = arith.cmpi sgt, %76, %c16_i32_21 : i32
    %true = arith.constant true
    %78 = arith.xori %77, %true : i1
    %79 = arith.extui %78 : i1 to i32
    %c0_i32_22 = arith.constant 0 : i32
    %80 = arith.cmpi ne, %79, %c0_i32_22 : i32
    scf.if %80 {
      %c0_24 = arith.constant 0 : index
      %c0_25 = arith.constant 0 : index
      %c0_26 = arith.constant 0 : index
      %83 = vector.load %arg5[%c0_24, %c0_25, %c0_26] : memref<1x8x128xf32, #tpu.memory_space<vmem>>, vector<1x8x128xf32>
      %84 = vector.shape_cast %72 : vector<16x128xf32> to vector<2x8x128xf32>
      %cst_27 = arith.constant dense<0.000000e+00> : vector<8x128xf32>
      %85 = vector.multi_reduction <add>, %84, %cst_27 [0] : vector<2x8x128xf32> to vector<8x128xf32>
      %86 = vector.shape_cast %85 : vector<8x128xf32> to vector<1x8x128xf32>
      %87 = arith.addf %83, %86 : vector<1x8x128xf32>
      %c0_28 = arith.constant 0 : index
      %c0_29 = arith.constant 0 : index
      %c0_30 = arith.constant 0 : index
      %88 = vector.load %arg5[%c0_28, %c0_29, %c0_30] : memref<1x8x128xf32, #tpu.memory_space<vmem>>, vector<1x8x128xf32>
      tpu.vector_store %arg5[%c0_28, %c0_29, %c0_30], %87 {strides = array<i32>} : memref<1x8x128xf32, #tpu.memory_space<vmem>>, vector<1x8x128xf32>,
      %c0_31 = arith.constant 0 : index
      %c0_32 = arith.constant 0 : index
      %c0_33 = arith.constant 0 : index
      %89 = vector.load %arg6[%c0_31, %c0_32, %c0_33] : memref<1x8x128xf32, #tpu.memory_space<vmem>>, vector<1x8x128xf32>
      %90 = vector.shape_cast %60 : vector<16x128xf32> to vector<2x8x128xf32>
      %cst_34 = arith.constant dense<0.000000e+00> : vector<8x128xf32>
      %91 = vector.multi_reduction <add>, %90, %cst_34 [0] : vector<2x8x128xf32> to vector<8x128xf32>
      %92 = vector.shape_cast %91 : vector<8x128xf32> to vector<1x8x128xf32>
      %93 = arith.addf %89, %92 : vector<1x8x128xf32>
      %c0_35 = arith.constant 0 : index
      %c0_36 = arith.constant 0 : index
      %c0_37 = arith.constant 0 : index
      %94 = vector.load %arg6[%c0_35, %c0_36, %c0_37] : memref<1x8x128xf32, #tpu.memory_space<vmem>>, vector<1x8x128xf32>
      tpu.vector_store %arg6[%c0_35, %c0_36, %c0_37], %93 {strides = array<i32>} : memref<1x8x128xf32, #tpu.memory_space<vmem>>, vector<1x8x128xf32>,
    } else {
    }
    %81 = arith.extui %77 : i1 to i32
    %c0_i32_23 = arith.constant 0 : i32
    %82 = arith.cmpi ne, %81, %c0_i32_23 : i32
    scf.if %82 {
      %83 = tpu.iota {dimensions = array<i32: 0>} : vector<16x128xi32>
      %c16_i32_24 = arith.constant 16 : i32
      %84 = arith.subi %c16_i32_24, %75 : i32
      %85 = vector.broadcast %84 : i32 to vector<16x128xi32>
      %86 = arith.cmpi slt, %83, %85 : vector<16x128xi32>
      %c0_25 = arith.constant 0 : index
      %c0_26 = arith.constant 0 : index
      %c0_27 = arith.constant 0 : index
      %87 = vector.load %arg5[%c0_25, %c0_26, %c0_27] : memref<1x8x128xf32, #tpu.memory_space<vmem>>, vector<1x8x128xf32>
      %cst_28 = arith.constant 0.000000e+00 : f32
      %88 = vector.broadcast %cst_28 : f32 to vector<16x128xf32>
      %89 = arith.select %86, %72, %88 : vector<16x128xi1>, vector<16x128xf32>
      %90 = vector.shape_cast %89 : vector<16x128xf32> to vector<2x8x128xf32>
      %cst_29 = arith.constant dense<0.000000e+00> : vector<8x128xf32>
      %91 = vector.multi_reduction <add>, %90, %cst_29 [0] : vector<2x8x128xf32> to vector<8x128xf32>
      %92 = vector.shape_cast %91 : vector<8x128xf32> to vector<1x8x128xf32>
      %93 = arith.addf %87, %92 : vector<1x8x128xf32>
      %c0_30 = arith.constant 0 : index
      %c0_31 = arith.constant 0 : index
      %c0_32 = arith.constant 0 : index
      %94 = vector.load %arg5[%c0_30, %c0_31, %c0_32] : memref<1x8x128xf32, #tpu.memory_space<vmem>>, vector<1x8x128xf32>
      tpu.vector_store %arg5[%c0_30, %c0_31, %c0_32], %93 {strides = array<i32>} : memref<1x8x128xf32, #tpu.memory_space<vmem>>, vector<1x8x128xf32>,
      %c0_33 = arith.constant 0 : index
      %c0_34 = arith.constant 0 : index
      %c0_35 = arith.constant 0 : index
      %95 = vector.load %arg6[%c0_33, %c0_34, %c0_35] : memref<1x8x128xf32, #tpu.memory_space<vmem>>, vector<1x8x128xf32>
      %cst_36 = arith.constant 0.000000e+00 : f32
      %96 = vector.broadcast %cst_36 : f32 to vector<16x128xf32>
      %97 = arith.select %86, %60, %96 : vector<16x128xi1>, vector<16x128xf32>
      %98 = vector.shape_cast %97 : vector<16x128xf32> to vector<2x8x128xf32>
      %cst_37 = arith.constant dense<0.000000e+00> : vector<8x128xf32>
      %99 = vector.multi_reduction <add>, %98, %cst_37 [0] : vector<2x8x128xf32> to vector<8x128xf32>
      %100 = vector.shape_cast %99 : vector<8x128xf32> to vector<1x8x128xf32>
      %101 = arith.addf %95, %100 : vector<1x8x128xf32>
      %c0_38 = arith.constant 0 : index
      %c0_39 = arith.constant 0 : index
      %c0_40 = arith.constant 0 : index
      %102 = vector.load %arg6[%c0_38, %c0_39, %c0_40] : memref<1x8x128xf32, #tpu.memory_space<vmem>>, vector<1x8x128xf32>
      tpu.vector_store %arg6[%c0_38, %c0_39, %c0_40], %101 {strides = array<i32>} : memref<1x8x128xf32, #tpu.memory_space<vmem>>, vector<1x8x128xf32>,
    } else {
    }
    return
  }
  func.func @transform_0(%arg0: i32, %arg1: i32, %arg2: memref<10xf32, #tpu.memory_space<smem>>) -> (i32, i32) {
    %c1_i32 = arith.constant 1 : i32
    %0 = arith.muli %arg0, %c1_i32 : i32
    %1 = arith.addi %0, %arg1 : i32
    %c0_i32 = arith.constant 0 : i32
    %2 = arith.minsi %1, %c0_i32 : i32
    %c0_i32_0 = arith.constant 0 : i32
    %c0_i32_1 = arith.constant 0 : i32
    return %2, %c0_i32_0 : i32, i32
  }
  func.func @transform_1(%arg0: i32, %arg1: i32, %arg2: memref<10xf32, #tpu.memory_space<smem>>) -> (i32, i32) {
    %c1_i32 = arith.constant 1 : i32
    %0 = arith.muli %arg0, %c1_i32 : i32
    %1 = arith.addi %0, %arg1 : i32
    %c0_i32 = arith.constant 0 : i32
    %2 = arith.minsi %1, %c0_i32 : i32
    %c0_i32_0 = arith.constant 0 : i32
    %c0_i32_1 = arith.constant 0 : i32
    return %2, %c0_i32_0 : i32, i32
  }
  func.func @transform_2(%arg0: i32, %arg1: i32, %arg2: memref<10xf32, #tpu.memory_space<smem>>) -> (i32, i32, i32) {
    %c0_i32 = arith.constant 0 : i32
    %c0_i32_0 = arith.constant 0 : i32
    %c0_i32_1 = arith.constant 0 : i32
    return %arg0, %c0_i32, %c0_i32_0 : i32, i32, i32
  }
  func.func @transform_3(%arg0: i32, %arg1: i32, %arg2: memref<10xf32, #tpu.memory_space<smem>>) -> (i32, i32, i32) {
    %c0_i32 = arith.constant 0 : i32
    %c0_i32_0 = arith.constant 0 : i32
    %c0_i32_1 = arith.constant 0 : i32
    return %arg0, %c0_i32, %c0_i32_0 : i32, i32, i32
  }
}

</mosaic_0001>

<llo_original>
// kernel: tpu_custom_call.1
$region0: #{tpu_custom_call.1}
  #allocation0 [shape = 'u32[]', space=smem, size = 0x4, offset = 0x4, fixed_abs, tag = 'smem constant byte address 0x4 - core index']
  #allocation1 [shape = 'u32[144,128]{1,0:T(1,128)}', space=vmem, size = 0x12000, scoped, tag = 'internal scratch']
  #allocation2 [shape = 's32[1]{0}', space=sflag, size = 0x4, scoped, tag = 'scoped memory for tpu_custom_call.1']
  #allocation3 [shape = 'u8[512]{0}', space=smem, size = 0x200, scoped, tag = 'prefetched SMEM operand 0']
  %s0 = inlined_call_operand.hbm [shape: f32[10], index: 0, kind: input, shape index: {}]
  %s1 = inlined_call_operand.hbm [shape: f32[16,128], index: 1, kind: input, shape index: {}]
  %s2 = inlined_call_operand.hbm [shape: f32[16,128], index: 2, kind: input, shape index: {}]
  %s3 = inlined_call_operand.hbm [shape: f32[1,8,128], index: 3, kind: output, shape index: {0}]
  %s4 = inlined_call_operand.hbm [shape: f32[1,8,128], index: 4, kind: output, shape index: {1}]
  %5 = xla_tuple %s3, %s4
  %s6 = sld [smem:[#allocation0]]
  $region46: #{tpu_custom_call.1} parent=0
    _
  %s8 = ssub.s32 1, %s6
  %s9 = scalar_select 0, %s8, %s6
  %11 = dma.hbm_to_smem %s0, 16, [#allocation3], [#allocation2]
  %12 = dma.done [#allocation2], 16
  %13 = sfence
  $region1: #{tpu_custom_call.1} parent=0
    #allocation4 [shape = 'u8[8192]{0}', space=vmem, size = 0x2000, scoped, tag = 'input window, operand 1, single buffered']
    #allocation5 [shape = 's32[1]{0}', space=sflag, size = 0x4, scoped, tag = 'scoped memory for tpu_custom_call.1']
    #allocation6 [shape = 's32[1]{0}', space=sflag, size = 0x4, scoped, tag = 'scoped memory for tpu_custom_call.1']
    #allocation7 [shape = 'u8[8192]{0}', space=vmem, size = 0x2000, scoped, tag = 'input window, operand 2, single buffered']
    #allocation8 [shape = 's32[1]{0}', space=sflag, size = 0x4, scoped, tag = 'scoped memory for tpu_custom_call.1']
    #allocation9 [shape = 'u8[4096]{0}', space=vmem, size = 0x1000, scoped, tag = 'output window, operand 0, single buffered']
    #allocation10 [shape = 'u8[4096]{0}', space=vmem, size = 0x1000, scoped, tag = 'output window, operand 1, single buffered']
    #allocation11 [shape = 's32[1]{0}', space=sflag, size = 0x4, scoped, tag = 'scoped memory for tpu_custom_call.1']
    %14 = vsyncpa [#allocation5], 0
    %15 = vsyncpa [#allocation8], 0
    %16 = vsyncpa [#allocation6], 0
    %17 = vsyncpa [#allocation11], 0
    // Predicated region
    $region2: #{tpu_custom_call.1} parent=1 // pred_check
      _
    $region3: #{tpu_custom_call.1} parent=1 // pred_check_branch
      %19 = sbr.rel (0) target = $region5
    $region4: #{tpu_custom_call.1} parent=1 // pred_region
      %s20 = sadd.s32 0, 0
      %p21 = scmp.lt.s32.totalorder %s20, 0
      %s22 = scalar_select %p21, %s20, 0
      %s23 = smul.u32 2, %s22
      %s25 = ssub.s32 256, 256
      %26 = vsyncadd [#allocation5], %s25
      %s27 = smul.addr %s23, 128
      %s28 = scalar_lea.hbm %s1, %s27
      %s29 = sshll.u32 [#allocation4], 4
      %s30 = int_to_ptr.vmem [resolvable:$true] %s29
      %35 = dma.hbm_to_vmem [thread:$0]  %s28, 256, %s30, [#allocation5], 128, 128, 8
    $region5: #{tpu_custom_call.1} parent=1 // pred_fallthru
      _
    // Predicated region
    $region6: #{tpu_custom_call.1} parent=1 // pred_check
      _
    $region7: #{tpu_custom_call.1} parent=1 // pred_check_branch
      %37 = sbr.rel (0) target = $region9
    $region8: #{tpu_custom_call.1} parent=1 // pred_region
      %s38 = sadd.s32 0, 0
      %p39 = scmp.lt.s32.totalorder %s38, 0
      %s40 = scalar_select %p39, %s38, 0
      %s41 = smul.u32 2, %s40
      %s43 = ssub.s32 256, 256
      %44 = vsyncadd [#allocation8], %s43
      %s45 = smul.addr %s41, 128
      %s46 = scalar_lea.hbm %s2, %s45
      %s47 = sshll.u32 [#allocation7], 4
      %s48 = int_to_ptr.vmem [resolvable:$true] %s47
      %53 = dma.hbm_to_vmem [thread:$0]  %s46, 256, %s48, [#allocation8], 128, 128, 8
    $region9: #{tpu_custom_call.1} parent=1 // pred_fallthru
      _
    // Predicated region
    $region10: #{tpu_custom_call.1} parent=1 // pred_check
      _
    $region11: #{tpu_custom_call.1} parent=1 // pred_check_branch
      %55 = sbr.rel (0) target = $region13
    $region12: #{tpu_custom_call.1} parent=1 // pred_region
      %56 = dma.done [#allocation5], 256
    $region13: #{tpu_custom_call.1} parent=1 // pred_fallthru
      _
    // Predicated region
    $region14: #{tpu_custom_call.1} parent=1 // pred_check
      _
    $region15: #{tpu_custom_call.1} parent=1 // pred_check_branch
      %58 = sbr.rel (0) target = $region17
    $region16: #{tpu_custom_call.1} parent=1 // pred_region
      %59 = dma.done [#allocation8], 256
    $region17: #{tpu_custom_call.1} parent=1 // pred_fallthru
      _
    %s60 = sadd.s32 0, 0
    %p61 = scmp.lt.s32.totalorder %s60, 0
    %s62 = scalar_select %p61, %s60, 0
    %s63 = smul.u32 2, %s62
    %s64 = sadd.s32 0, 0
    %p65 = scmp.lt.s32.totalorder %s64, 0
    %s66 = scalar_select %p65, %s64, 0
    %s67 = smul.u32 2, %s66
    %p68 = scmp.eq.s32.totalorder 0, 0
    // Predicated region
    $region18: #{tpu_custom_call.1} parent=1 // pred_check
      %p69 = pneg %p68
    $region19: #{tpu_custom_call.1} parent=1 // pred_check_branch
      %71 = sbr.rel (%p69) target = $region21
    $region20: #{tpu_custom_call.1} parent=1 // pred_region
      %72 = vst [vmem:[#allocation9] sm:$0xff] 0.0
      %73 = vst [vmem:[#allocation10] sm:$0xff] 0.0
    $region21: #{tpu_custom_call.1} parent=1 // pred_fallthru
      _
    %v74 = vld [vmem:[#allocation7] sm:$0xff]
    %v75 = vld [vmem:[#allocation7 + $0x8] sm:$0xff]
    %v76 = vld [vmem:[#allocation4] sm:$0xff]
    %v77 = vld [vmem:[#allocation4 + $0x8] sm:$0xff]
    %v78 = vmul.f32 %v74, 9.0
    %v79 = vmul.f32 %v75, 9.0
    %v80 = vsub.f32 %v78, 0.5
    %v81 = vsub.f32 %v79, 0.5
    %v82 = vceil.f32 %v80
    %v83 = vceil.f32 %v81
    %vm84 = vcmp.eq.f32.partialorder %v82, 0.0
    %vm85 = vcmp.eq.f32.partialorder %v83, 0.0
    %s86 = sld [smem:[#allocation3]]
    %v87 = vstv %s86
    %v88 = vsel %vm84, %v87, 0.0
    %v89 = vsel %vm85, %v87, 0.0
    %vm90 = vcmp.eq.f32.partialorder %v82, 1.0
    %vm91 = vcmp.eq.f32.partialorder %v83, 1.0
    %s92 = sld [smem:[#allocation3 + $0x1]]
    %v93 = vstv %s92
    %v94 = vsel %vm90, %v93, %v88
    %v95 = vsel %vm91, %v93, %v89
    %vm96 = vcmp.eq.f32.partialorder %v82, 2.0
    %vm97 = vcmp.eq.f32.partialorder %v83, 2.0
    %s98 = sld [smem:[#allocation3 + $0x2]]
    %v99 = vstv %s98
    %v100 = vsel %vm96, %v99, %v94
    %v101 = vsel %vm97, %v99, %v95
    %vm102 = vcmp.eq.f32.partialorder %v82, 3.0
    %vm103 = vcmp.eq.f32.partialorder %v83, 3.0
    %s104 = sld [smem:[#allocation3 + $0x3]]
    %v105 = vstv %s104
    %v106 = vsel %vm102, %v105, %v100
    %v107 = vsel %vm103, %v105, %v101
    %vm108 = vcmp.eq.f32.partialorder %v82, 4.0
    %vm109 = vcmp.eq.f32.partialorder %v83, 4.0
    %s110 = sld [smem:[#allocation3 + $0x4]]
    %v111 = vstv %s110
    %v112 = vsel %vm108, %v111, %v106
    %v113 = vsel %vm109, %v111, %v107
    %vm114 = vcmp.eq.f32.partialorder %v82, 5.0
    %vm115 = vcmp.eq.f32.partialorder %v83, 5.0
    %s116 = sld [smem:[#allocation3 + $0x5]]
    %v117 = vstv %s116
    %v118 = vsel %vm114, %v117, %v112
    %v119 = vsel %vm115, %v117, %v113
    %vm120 = vcmp.eq.f32.partialorder %v82, 6.0
    %vm121 = vcmp.eq.f32.partialorder %v83, 6.0
    %s122 = sld [smem:[#allocation3 + $0x6]]
    %v123 = vstv %s122
    %v124 = vsel %vm120, %v123, %v118
    %v125 = vsel %vm121, %v123, %v119
    %vm126 = vcmp.eq.f32.partialorder %v82, 7.0
    %vm127 = vcmp.eq.f32.partialorder %v83, 7.0
    %s128 = sld [smem:[#allocation3 + $0x7]]
    %v129 = vstv %s128
    %v130 = vsel %vm126, %v129, %v124
    %v131 = vsel %vm127, %v129, %v125
    %vm132 = vcmp.eq.f32.partialorder %v82, 8.0
    %vm133 = vcmp.eq.f32.partialorder %v83, 8.0
    %s134 = sld [smem:[#allocation3 + $0x8]]
    %v135 = vstv %s134
    %v136 = vsel %vm132, %v135, %v130
    %v137 = vsel %vm133, %v135, %v131
    %vm138 = vcmp.eq.f32.partialorder %v82, 9.0
    %vm139 = vcmp.eq.f32.partialorder %v83, 9.0
    %s140 = sld [smem:[#allocation3 + $0x9]]
    %v141 = vstv %s140
    %v142 = vsel %vm138, %v141, %v136
    %v143 = vsel %vm139, %v141, %v137
    %v144 = vlog2.pop %v76
    %v145 = vmul.f32 %v144, 0.6931472
    %v146 = vlog2.pop %v77
    %v147 = vmul.f32 %v146, 0.6931472
    %v148 = vmax.f32 %v145, -100.0
    %v149 = vmax.f32 %v147, -100.0
    %v150 = vsub.f32 1.0, %v76
    %v151 = vsub.f32 1.0, %v77
    %v152 = vlog2.pop %v150
    %v153 = vmul.f32 %v152, 0.6931472
    %v154 = vlog2.pop %v151
    %v155 = vmul.f32 %v154, 0.6931472
    %v156 = vmax.f32 %v153, -100.0
    %v157 = vmax.f32 %v155, -100.0
    %v158 = vsub.f32 %v148, %v156
    %v159 = vsub.f32 %v149, %v157
    %v160 = vmul.f32 %v74, %v158
    %v161 = vmul.f32 %v75, %v159
    %v162 = vadd.f32 %v160, %v156
    %v163 = vadd.f32 %v161, %v157
    %v164 = vmul.f32 %v142, %v162
    %v165 = vmul.f32 %v143, %v163
    %s166 = sadd.s32 0, 0
    %s167 = smul.u32 %s166, 16
    %s168 = sadd.s32 %s167, 16
    %p169 = scmp.gt.s32.totalorder %s168, 16
    %p170 = scmp.le.s32.totalorder %s168, 16
    // Predicated region
    $region22: #{tpu_custom_call.1} parent=1 // pred_check
      %p171 = pneg %p170
    $region23: #{tpu_custom_call.1} parent=1 // pred_check_branch
      %173 = sbr.rel (%p171) target = $region25
    $region24: #{tpu_custom_call.1} parent=1 // pred_region
      %v174 = vld [vmem:[#allocation9] sm:$0xff]
      %v175 = vadd.f32 %v164, %v165
      %v176 = vadd.f32 %v174, %v175
      %177 = vst [vmem:[#allocation9] sm:$0xff] %v176
      %v178 = vld [vmem:[#allocation10] sm:$0xff]
      %v179 = vadd.f32 %v142, %v143
      %v180 = vadd.f32 %v178, %v179
      %181 = vst [vmem:[#allocation10] sm:$0xff] %v180
    $region25: #{tpu_custom_call.1} parent=1 // pred_fallthru
      _
    // Predicated region
    $region26: #{tpu_custom_call.1} parent=1 // pred_check
      %p182 = pneg %p169
    $region27: #{tpu_custom_call.1} parent=1 // pred_check_branch
      %184 = sbr.rel (%p182) target = $region29
    $region28: #{tpu_custom_call.1} parent=1 // pred_region
      %v185 = vlaneseq
      %v186 = vshrl.u32 %v185, 7
      %v187 = vadd.s32 %v186, 8
      %s188 = ssub.s32 16, %s167
      %v189 = vstv %s188
      %vm190 = vcmp.lt.s32.totalorder %v186, %v189
      %vm191 = vcmp.lt.s32.totalorder %v187, %v189
      %v192 = vld [vmem:[#allocation9] sm:$0xff]
      %v193 = vsel %vm190, %v164, 0.0
      %v194 = vsel %vm191, %v165, 0.0
      %v195 = vadd.f32 %v193, %v194
      %v196 = vadd.f32 %v192, %v195
      %197 = vst [vmem:[#allocation9] sm:$0xff] %v196
      %v198 = vld [vmem:[#allocation10] sm:$0xff]
      %v199 = vsel %vm190, %v142, 0.0
      %v200 = vsel %vm191, %v143, 0.0
      %v201 = vadd.f32 %v199, %v200
      %v202 = vadd.f32 %v198, %v201
      %203 = vst [vmem:[#allocation10] sm:$0xff] %v202
    $region29: #{tpu_custom_call.1} parent=1 // pred_fallthru
      _
    // Predicated region
    $region30: #{tpu_custom_call.1} parent=1 // pred_check
      _
    $region31: #{tpu_custom_call.1} parent=1 // pred_check_branch
      %205 = sbr.rel (0) target = $region33
    $region32: #{tpu_custom_call.1} parent=1 // pred_region
      %s207 = ssub.s32 128, 128
      %208 = vsyncadd [#allocation6], %s207
      %s210 = sshll.u32 [#allocation9], 4
      %s211 = int_to_ptr.vmem [resolvable:$true] %s210
      %213 = dma.vmem_to_hbm [thread:$0]  %s211, 128, %s3, [#allocation6]
    $region33: #{tpu_custom_call.1} parent=1 // pred_fallthru
      _
    // Predicated region
    $region34: #{tpu_custom_call.1} parent=1 // pred_check
      _
    $region35: #{tpu_custom_call.1} parent=1 // pred_check_branch
      %215 = sbr.rel (0) target = $region37
    $region36: #{tpu_custom_call.1} parent=1 // pred_region
      %s217 = ssub.s32 128, 128
      %218 = vsyncadd [#allocation11], %s217
      %s220 = sshll.u32 [#allocation10], 4
      %s221 = int_to_ptr.vmem [resolvable:$true] %s220
      %223 = dma.vmem_to_hbm [thread:$0]  %s221, 128, %s4, [#allocation11]
    $region37: #{tpu_custom_call.1} parent=1 // pred_fallthru
      _
    // Predicated region
    $region38: #{tpu_custom_call.1} parent=1 // pred_check
      _
    $region39: #{tpu_custom_call.1} parent=1 // pred_check_branch
      %225 = sbr.rel (0) target = $region41
    $region40: #{tpu_custom_call.1} parent=1 // pred_region
      %226 = dma.done [#allocation6], 128
    $region41: #{tpu_custom_call.1} parent=1 // pred_fallthru
      _
    // Predicated region
    $region42: #{tpu_custom_call.1} parent=1 // pred_check
      _
    $region43: #{tpu_custom_call.1} parent=1 // pred_check_branch
      %228 = sbr.rel (0) target = $region45
    $region44: #{tpu_custom_call.1} parent=1 // pred_region
      %229 = dma.done [#allocation11], 128
    $region45: #{tpu_custom_call.1} parent=1 // pred_fallthru
      _
    %230 = vsyncpa [#allocation5], 1
    %231 = vsyncpa [#allocation8], 1
    %232 = vsyncpa [#allocation6], 1
    %233 = vsyncpa [#allocation11], 1

</llo_original>
